<compile_context>
chip_gen: v7x
topology: tpu7x:2x2x1
jax: 0.10.0
libtpu: 0.0.40
codegen_flags: <defaults>
</compile_context>

<pallas_src>
import functools

import jax
import jax.numpy as jnp
from jax import lax
from jax.experimental import pallas as pl
from jax.experimental.pallas import tpu as pltpu


def _memory_kernel(z_ref, mem_ref, mem_n_ref, zhat_ref, energy_ref, zeros_ref, *,
                   lbd, batch, block_b, matmul_dtype):
    eps = 1e-8  # torch.nn.CosineSimilarity default eps
    i = pl.program_id(0)

    z = z_ref[...].astype(jnp.float32)            # (TB, Dp)

    # Static: only compiled when the last batch tile hangs past B (not at test shapes).
    partial = (batch % block_b) != 0
    if partial:
        row = i * block_b + lax.broadcasted_iota(jnp.int32, (block_b, 1), 0)
        valid = (row < batch).astype(jnp.float32)  # (TB, 1)
        z = z * valid                              # neutralize padded garbage rows
    else:
        valid = None

    # --- cosine similarity; mem's row normalization was hoisted to the wrapper ---
    z_sq = jnp.sum(z * z, axis=-1, keepdims=True)                      # (TB, 1)
    inv_zn = lax.rsqrt(jnp.maximum(z_sq, eps * eps))                   # 1 / max(||z||, eps)
    dots = lax.dot_general(
        z.astype(matmul_dtype), mem_n_ref[...],
        (((1,), (1,)), ((), ())), preferred_element_type=jnp.float32)  # (TB, C)
    cos = dots * inv_zn

    # --- softmax over the capacity axis (reciprocal-multiply, exact reciprocal) ---
    cmax = jnp.max(cos, axis=1, keepdims=True)
    ex = jnp.exp(cos - cmax)
    w = ex * pl.reciprocal(jnp.sum(ex, axis=1, keepdims=True))         # (TB, C)

    # --- hard shrinkage: max(w-lbd,0)*w/(|w-lbd|+1e-15)  ==  where(w>lbd, w, 0) ---
    mask = w > lbd
    w_hat = jnp.where(mask, w, 0.0)

    # per-block zero-count partial: reuse the compare, sublane-only reduce -> (1, C);
    # the cross-lane sum and the /B happen in the wrapper.
    zeros = jnp.where(mask, 0.0, 1.0)
    if partial:
        zeros = zeros * valid
    zeros_ref[...] = jnp.sum(zeros, axis=0, keepdims=True).reshape(1, 1, -1)

    # --- renormalize ---
    w_hat_p = w_hat + 1e-15
    w_hat_n = w_hat_p * pl.reciprocal(jnp.sum(w_hat_p, axis=1, keepdims=True))

    # --- per-block addressing-energy partial: (-w_hat * log(w_hat + 0.001)).sum over batch
    e = -w_hat_n * jnp.log(w_hat_n + 0.001)                            # (TB, C)
    if partial:
        e = e * valid
    energy_ref[...] = jnp.sum(e, axis=0, keepdims=True).reshape(1, 1, -1)

    # --- z_hat = w_hat_n @ mem (original, un-normalized memory rows) ---
    zhat_ref[...] = lax.dot_general(
        w_hat_n.astype(matmul_dtype), mem_ref[...],
        (((1,), (0,)), ((), ())),
        preferred_element_type=jnp.float32).astype(zhat_ref.dtype)


def _vmem_estimate_bytes(tb, C, D_pad, mm_itemsize):
    io = 2 * 2 * tb * D_pad * 4                    # z in + z_hat out, double-buffered f32
    residents = 2 * 2 * C * D_pad * mm_itemsize    # mem + mem_n (each double-buffered)
    temps = 8 * tb * C * 4                         # ~8 live (tb, C) f32 temporaries
    return io + residents + temps


def memory_forward(z, mem, lbd=0.02, block_b=512, matmul_dtype=jnp.float32,
                   vmem_limit_bytes=32 * 1024 * 1024):
    """Pallas implementation of Memory.forward.

    Returns (z_hat, addressing_energy, zero_mean).

    * Batch is tiled over a "parallel" grid axis (2-TC megacore on v7x); energy and
      zero-count are per-block partial outputs reduced in the wrapper (no carried state).
    * The memory bank's normalization and matmul-dtype casts are grid-invariant and
      hoisted to the wrapper; mem / mem_n stay resident across the grid.
    * D is zero-padded to a multiple of 128 lanes (exact no-op) so loads/stores are
      lane-dense; z_hat is sliced back to D.
    * matmul_dtype=jnp.bfloat16 is a valid opt-in on v5e, v6e and v7x (bf16 MXU
      everywhere, halves matmul-operand footprint); keep float32 when tight (1e-4)
      agreement with the fp32 reference matters.
    * block_b is capped by a VMEM estimate against vmem_limit_bytes (raises v5e's
      16 MiB scoped default; stays well inside v7x's 64 MiB/TC).
    """
    B, D = z.shape
    C, D2 = mem.shape
    assert D == D2
    eps = 1e-8

    # Lane-dense feature axis: zero-pad D up to a multiple of 128.
    D_pad = ((D + 127) // 128) * 128
    if D_pad != D:
        z_p = jnp.pad(z, ((0, 0), (0, D_pad - D)))
        mem_p = jnp.pad(mem, ((0, 0), (0, D_pad - D)))
    else:
        z_p, mem_p = z, mem

    # Hoisted (grid-invariant) memory-bank row normalization + matmul-dtype casts.
    m_sq = jnp.sum(mem_p * mem_p, axis=-1, keepdims=True)              # (C, 1)
    mem_n = (mem_p * lax.rsqrt(jnp.maximum(m_sq, eps * eps))).astype(matmul_dtype)
    mem_c = mem_p.astype(matmul_dtype)

    mm_itemsize = jnp.dtype(matmul_dtype).itemsize
    if B <= block_b:
        tb = B                       # single block: shape equals full array -> always legal
    else:
        assert block_b % 8 == 0, "batch tile must be a multiple of 8 sublanes"
        tb = block_b
        budget = int(0.6 * vmem_limit_bytes)
        while tb > 8 and _vmem_estimate_bytes(tb, C, D_pad, mm_itemsize) > budget:
            tb //= 2
        tb = max(8, tb)
    num_blocks = pl.cdiv(B, tb)

    kernel = functools.partial(
        _memory_kernel, lbd=lbd, batch=B, block_b=tb, matmul_dtype=matmul_dtype)

    z_hat_p, energy_part, zeros_part = pl.pallas_call(
        kernel,
        grid=(num_blocks,),
        out_shape=(
            jax.ShapeDtypeStruct((B, D_pad), jnp.float32),        # z_hat (padded)
            jax.ShapeDtypeStruct((num_blocks, 1, C), jnp.float32),  # energy partials
            jax.ShapeDtypeStruct((num_blocks, 1, C), jnp.float32),  # zero-count partials
        ),
        in_specs=[
            pl.BlockSpec((tb, D_pad), lambda i: (i, 0)),          # z: tiled over batch
            pl.BlockSpec((C, D_pad), lambda i: (0, 0)),           # mem: resident
            pl.BlockSpec((C, D_pad), lambda i: (0, 0)),           # mem_n: resident
        ],
        out_specs=(
            pl.BlockSpec((tb, D_pad), lambda i: (i, 0)),          # z_hat: tiled over batch
            pl.BlockSpec((1, 1, C), lambda i: (i, 0, 0)),         # per-block energy
            pl.BlockSpec((1, 1, C), lambda i: (i, 0, 0)),         # per-block zero count
        ),
        compiler_params=pltpu.CompilerParams(
            dimension_semantics=("parallel",),
            vmem_limit_bytes=vmem_limit_bytes),
    )(z_p, mem_c, mem_n)

    z_hat = z_hat_p[:, :D]
    energy = jnp.sum(energy_part, axis=(0, 1))      # (C,)
    zero_mean = jnp.sum(zeros_part) / B
    return z_hat, energy, zero_mean


def memory_forward_ref(z, mem, lbd=0.02):
    """Pure-JAX reference mirroring the PyTorch semantics (for verification)."""
    eps = 1e-8
    z_n = jnp.sqrt(jnp.maximum(jnp.sum(z * z, -1, keepdims=True), eps * eps))
    m_n = jnp.sqrt(jnp.maximum(jnp.sum(mem * mem, -1, keepdims=True), eps * eps))
    cos = (z @ mem.T) / (z_n * m_n.T)
    w = jax.nn.softmax(cos, axis=1)
    t = w - lbd
    w_hat = jnp.maximum(t, 0.0) * w / (jnp.abs(t) + 1e-15)
    zero_mean = jnp.mean(jnp.sum((w_hat == 0).astype(jnp.float32), axis=1))
    w_hat = (w_hat + 1e-15) / jnp.sum(w_hat + 1e-15, axis=1, keepdims=True)
    energy = jnp.sum(-w_hat * jnp.log(w_hat + 0.001), axis=0)
    z_hat = w_hat @ mem
    return z_hat, energy, zero_mean


if __name__ == "__main__":
    # Small shapes consistent with the module: latent dim 32, capacity 128, batch 8.
    B, DIM, CAP = 8, 32, 128
    LBD = 0.02

    key = jax.random.PRNGKey(0)
    kz, kmem = jax.random.split(key)
    z = jax.random.normal(kz, (B, DIM), dtype=jnp.float32)
    # Deterministic synthetic parameter init, matching torch.rand (uniform [0,1)).
    mem = jax.random.uniform(kmem, (CAP, DIM), dtype=jnp.float32)

    z_hat, energy, zero_mean = memory_forward(z, mem, lbd=LBD)
    jax.block_until_ready((z_hat, energy, zero_mean))

    # Reproduce the module's print side-effect (value computed in-kernel, printed here).
    print("average number of 0ed adresses", float(zero_mean))

    # Correctness check against the pure-JAX reference.
    z_hat_ref, energy_ref, zero_ref = memory_forward_ref(z, mem, lbd=LBD)
    assert jnp.allclose(z_hat, z_hat_ref, atol=1e-4, rtol=1e-4)
    assert jnp.allclose(energy, energy_ref, atol=1e-4, rtol=1e-4)
    assert abs(float(zero_mean) - float(zero_ref)) < 1e-3

    print("KERNEL_OK")
</pallas_src>

<mosaic_0001>
module attributes {stable_mosaic.version = 11 : i64} {
  func.func @_memory_kernel(%arg0: i32, %arg1: memref<8x128xf32, #tpu.memory_space<vmem>>, %arg2: memref<128x128xf32, #tpu.memory_space<vmem>>, %arg3: memref<128x128xf32, #tpu.memory_space<vmem>>, %arg4: memref<8x128xf32, #tpu.memory_space<vmem>>, %arg5: memref<1x1x128xf32, #tpu.memory_space<vmem>>, %arg6: memref<1x1x128xf32, #tpu.memory_space<vmem>>) attributes {dimension_semantics = [#tpu.dimension_semantics<parallel>], iteration_bounds = array<i64: 1>, scalar_prefetch = 0 : i64, scratch_operands = 0 : i64, tpu.core_type = #tpu.core_type<tc>, window_params = [{transform_indices = @transform_0, window_bounds = array<i64: 8, 128>}, {pipeline_mode = #tpu.pipeline_mode<synchronous>, transform_indices = @transform_1, window_bounds = array<i64: 128, 128>}, {pipeline_mode = #tpu.pipeline_mode<synchronous>, transform_indices = @transform_2, window_bounds = array<i64: 128, 128>}, {transform_indices = @transform_3, window_bounds = array<i64: 8, 128>}, {transform_indices = @transform_4, window_bounds = array<i64: 1, 1, 128>}, {transform_indices = @transform_5, window_bounds = array<i64: 1, 1, 128>}]} {
    %c0 = arith.constant 0 : index
    %c0_0 = arith.constant 0 : index
    %0 = vector.load %arg1[%c0, %c0_0] : memref<8x128xf32, #tpu.memory_space<vmem>>, vector<8x128xf32>
    %1 = arith.mulf %0, %0 : vector<8x128xf32>
    %cst = arith.constant dense<0.000000e+00> : vector<8xf32>
    %2 = vector.multi_reduction <add>, %1, %cst [1] : vector<8x128xf32> to vector<8xf32>
    %3 = vector.shape_cast %2 : vector<8xf32> to vector<8x1xf32>
    %cst_1 = arith.constant 1.000000e-16 : f32
    %4 = vector.broadcast %cst_1 : f32 to vector<8x1xf32>
    %5 = arith.maximumf %3, %4 : vector<8x1xf32>
    %6 = math.rsqrt %5 : vector<8x1xf32>
    %c0_2 = arith.constant 0 : index
    %c0_3 = arith.constant 0 : index
    %7 = vector.load %arg3[%c0_2, %c0_3] : memref<128x128xf32, #tpu.memory_space<vmem>>, vector<128x128xf32>
    %cst_4 = arith.constant dense<0.000000e+00> : vector<8x128xf32>
    %8 = tpu.matmul %0, %7, %cst_4 {dimension_numbers = #tpu.dot_dimension_numbers<[1], [1], [0], [0], [0, 0, 1, 0], [], []>} : vector<8x128xf32>, vector<128x128xf32>, vector<8x128xf32> -> vector<8x128xf32>
    %9 = vector.broadcast %6 : vector<8x1xf32> to vector<8x128xf32>
    %10 = arith.mulf %8, %9 : vector<8x128xf32>
    %cst_5 = arith.constant dense<0xFF800000> : vector<8xf32>
    %11 = vector.multi_reduction <maximumf>, %10, %cst_5 [1] : vector<8x128xf32> to vector<8xf32>
    %12 = vector.shape_cast %11 : vector<8xf32> to vector<8x1xf32>
    %13 = vector.broadcast %12 : vector<8x1xf32> to vector<8x128xf32>
    %14 = arith.subf %10, %13 : vector<8x128xf32>
    %15 = math.exp %14 : vector<8x128xf32>
    %cst_6 = arith.constant dense<0.000000e+00> : vector<8xf32>
    %16 = vector.multi_reduction <add>, %15, %cst_6 [1] : vector<8x128xf32> to vector<8xf32>
    %17 = vector.shape_cast %16 : vector<8xf32> to vector<8x1xf32>
    %18 = tpu.reciprocal %17 : vector<8x1xf32> -> vector<8x1xf32>
    %19 = vector.broadcast %18 : vector<8x1xf32> to vector<8x128xf32>
    %20 = arith.mulf %15, %19 : vector<8x128xf32>
    %cst_7 = arith.constant 2.000000e-02 : f32
    %21 = vector.broadcast %cst_7 : f32 to vector<8x128xf32>
    %22 = arith.cmpf ogt, %20, %21 : vector<8x128xf32>
    %cst_8 = arith.constant 0.000000e+00 : f32
    %23 = vector.broadcast %cst_8 : f32 to vector<8x128xf32>
    %24 = arith.select %22, %20, %23 : vector<8x128xi1>, vector<8x128xf32>
    %cst_9 = arith.constant 0.000000e+00 : f32
    %cst_10 = arith.constant 1.000000e+00 : f32
    %25 = vector.broadcast %cst_9 : f32 to vector<8x128xf32>
    %26 = vector.broadcast %cst_10 : f32 to vector<8x128xf32>
    %27 = arith.select %22, %25, %26 : vector<8x128xi1>, vector<8x128xf32>
    %cst_11 = arith.constant dense<0.000000e+00> : vector<128xf32>
    %28 = vector.multi_reduction <add>, %27, %cst_11 [0] : vector<8x128xf32> to vector<128xf32>
    %29 = vector.shape_cast %28 : vector<128xf32> to vector<1x128xf32>
    %30 = vector.shape_cast %29 : vector<1x128xf32> to vector<1x1x128xf32>
    %c0_12 = arith.constant 0 : index
    %c0_13 = arith.constant 0 : index
    %c0_14 = arith.constant 0 : index
    %31 = vector.load %arg6[%c0_12, %c0_13, %c0_14] : memref<1x1x128xf32, #tpu.memory_space<vmem>>, vector<1x1x128xf32>
    tpu.vector_store %arg6[%c0_12, %c0_13, %c0_14], %30 {strides = array<i32>} : memref<1x1x128xf32, #tpu.memory_space<vmem>>, vector<1x1x128xf32>,
    %cst_15 = arith.constant 1.000000e-15 : f32
    %32 = vector.broadcast %cst_15 : f32 to vector<8x128xf32>
    %33 = arith.addf %24, %32 : vector<8x128xf32>
    %cst_16 = arith.constant dense<0.000000e+00> : vector<8xf32>
    %34 = vector.multi_reduction <add>, %33, %cst_16 [1] : vector<8x128xf32> to vector<8xf32>
    %35 = vector.shape_cast %34 : vector<8xf32> to vector<8x1xf32>
    %36 = tpu.reciprocal %35 : vector<8x1xf32> -> vector<8x1xf32>
    %37 = vector.broadcast %36 : vector<8x1xf32> to vector<8x128xf32>
    %38 = arith.mulf %33, %37 : vector<8x128xf32>
    %cst_17 = arith.constant 0.000000e+00 : f32
    %39 = vector.broadcast %cst_17 : f32 to vector<8x128xf32>
    %40 = arith.subf %39, %38 : vector<8x128xf32>
    %cst_18 = arith.constant 1.000000e-03 : f32
    %41 = vector.broadcast %cst_18 : f32 to vector<8x128xf32>
    %42 = arith.addf %38, %41 : vector<8x128xf32>
    %43 = math.log %42 : vector<8x128xf32>
    %44 = arith.mulf %40, %43 : vector<8x128xf32>
    %cst_19 = arith.constant dense<0.000000e+00> : vector<128xf32>
    %45 = vector.multi_reduction <add>, %44, %cst_19 [0] : vector<8x128xf32> to vector<128xf32>
    %46 = vector.shape_cast %45 : vector<128xf32> to vector<1x128xf32>
    %47 = vector.shape_cast %46 : vector<1x128xf32> to vector<1x1x128xf32>
    %c0_20 = arith.constant 0 : index
    %c0_21 = arith.constant 0 : index
    %c0_22 = arith.constant 0 : index
    %48 = vector.load %arg5[%c0_20, %c0_21, %c0_22] : memref<1x1x128xf32, #tpu.memory_space<vmem>>, vector<1x1x128xf32>
    tpu.vector_store %arg5[%c0_20, %c0_21, %c0_22], %47 {strides = array<i32>} : memref<1x1x128xf32, #tpu.memory_space<vmem>>, vector<1x1x128xf32>,
    %c0_23 = arith.constant 0 : index
    %c0_24 = arith.constant 0 : index
    %49 = vector.load %arg2[%c0_23, %c0_24] : memref<128x128xf32, #tpu.memory_space<vmem>>, vector<128x128xf32>
    %cst_25 = arith.constant dense<0.000000e+00> : vector<8x128xf32>
    %50 = tpu.matmul %38, %49, %cst_25 {dimension_numbers = #tpu.dot_dimension_numbers<[1], [0], [0], [1], [0, 0, 1, 1], [], []>} : vector<8x128xf32>, vector<128x128xf32>, vector<8x128xf32> -> vector<8x128xf32>
    %c0_26 = arith.constant 0 : index
    %c0_27 = arith.constant 0 : index
    %51 = vector.load %arg4[%c0_26, %c0_27] : memref<8x128xf32, #tpu.memory_space<vmem>>, vector<8x128xf32>
    tpu.vector_store %arg4[%c0_26, %c0_27], %50 {strides = array<i32>} : memref<8x128xf32, #tpu.memory_space<vmem>>, vector<8x128xf32>,
    return
  }
  func.func @transform_0(%arg0: i32) -> (i32, i32) {
    %c0_i32 = arith.constant 0 : i32
    %c0_i32_0 = arith.constant 0 : i32
    return %arg0, %c0_i32 : i32, i32
  }
  func.func @transform_1(%arg0: i32) -> (i32, i32) {
    %c0_i32 = arith.constant 0 : i32
    %c0_i32_0 = arith.constant 0 : i32
    %c0_i32_1 = arith.constant 0 : i32
    return %c0_i32, %c0_i32_0 : i32, i32
  }
  func.func @transform_2(%arg0: i32) -> (i32, i32) {
    %c0_i32 = arith.constant 0 : i32
    %c0_i32_0 = arith.constant 0 : i32
    %c0_i32_1 = arith.constant 0 : i32
    return %c0_i32, %c0_i32_0 : i32, i32
  }
  func.func @transform_3(%arg0: i32) -> (i32, i32) {
    %c0_i32 = arith.constant 0 : i32
    %c0_i32_0 = arith.constant 0 : i32
    return %arg0, %c0_i32 : i32, i32
  }
  func.func @transform_4(%arg0: i32) -> (i32, i32, i32) {
    %c0_i32 = arith.constant 0 : i32
    %c0_i32_0 = arith.constant 0 : i32
    %c0_i32_1 = arith.constant 0 : i32
    return %arg0, %c0_i32, %c0_i32_0 : i32, i32, i32
  }
  func.func @transform_5(%arg0: i32) -> (i32, i32, i32) {
    %c0_i32 = arith.constant 0 : i32
    %c0_i32_0 = arith.constant 0 : i32
    %c0_i32_1 = arith.constant 0 : i32
    return %arg0, %c0_i32, %c0_i32_0 : i32, i32, i32
  }
}

</mosaic_0001>

<llo_original>
// kernel: tpu_custom_call.1
$region0: #{tpu_custom_call.1}
  #allocation0 [shape = 'u32[]', space=smem, size = 0x4, offset = 0x4, fixed_abs, tag = 'smem constant byte address 0x4 - core index']
  #allocation1 [shape = 'u32[144,128]{1,0:T(1,128)}', space=vmem, size = 0x12000, scoped, tag = 'internal scratch']
  %s0 = inlined_call_operand.hbm [shape: f32[8,128], index: 0, kind: input, shape index: {}]
  %s1 = inlined_call_operand.hbm [shape: f32[128,128], index: 1, kind: input, shape index: {}]
  %s2 = inlined_call_operand.hbm [shape: f32[128,128], index: 2, kind: input, shape index: {}]
  %s3 = inlined_call_operand.hbm [shape: f32[8,128], index: 3, kind: output, shape index: {0}]
  %s4 = inlined_call_operand.hbm [shape: f32[1,1,128], index: 4, kind: output, shape index: {1}]
  %s5 = inlined_call_operand.hbm [shape: f32[1,1,128], index: 5, kind: output, shape index: {2}]
  %6 = xla_tuple %s3, %s4, %s5
  %s7 = sld [smem:[#allocation0]]
  $region50: #{tpu_custom_call.1} parent=0
    _
  %s9 = ssub.s32 1, %s7
  %s10 = scalar_select 0, %s9, %s7
  $region1: #{tpu_custom_call.1} parent=0
    #allocation2 [shape = 'u8[4096]{0}', space=vmem, size = 0x1000, scoped, tag = 'input window, operand 0, single buffered']
    #allocation3 [shape = 's32[1]{0}', space=sflag, size = 0x4, scoped, tag = 'scoped memory for tpu_custom_call.1']
    #allocation4 [shape = 's32[1]{0}', space=sflag, size = 0x4, scoped, tag = 'scoped memory for tpu_custom_call.1']
    #allocation5 [shape = 'u8[65536]{0}', space=vmem, size = 0x10000, scoped, tag = 'input window, operand 1, single buffered']
    #allocation6 [shape = 's32[1]{0}', space=sflag, size = 0x4, scoped, tag = 'scoped memory for tpu_custom_call.1']
    #allocation7 [shape = 'u8[65536]{0}', space=vmem, size = 0x10000, scoped, tag = 'input window, operand 2, single buffered']
    #allocation8 [shape = 'u8[4096]{0}', space=vmem, size = 0x1000, scoped, tag = 'output window, operand 0, single buffered']
    #allocation9 [shape = 'u8[512]{0}', space=vmem, size = 0x400, scoped, tag = 'output window, operand 1, single buffered']
    #allocation10 [shape = 's32[1]{0}', space=sflag, size = 0x4, scoped, tag = 'scoped memory for tpu_custom_call.1']
    #allocation11 [shape = 'u8[512]{0}', space=vmem, size = 0x400, scoped, tag = 'output window, operand 2, single buffered']
    %11 = vsyncpa [#allocation3], 0
    %12 = vsyncpa [#allocation6], 0
    %13 = vsyncpa [#allocation4], 0
    %14 = vsyncpa [#allocation10], 0
    // Predicated region
    $region2: #{tpu_custom_call.1} parent=1 // pred_check
      _
    $region3: #{tpu_custom_call.1} parent=1 // pred_check_branch
      %16 = sbr.rel (0) target = $region5
    $region4: #{tpu_custom_call.1} parent=1 // pred_region
      %s18 = ssub.s32 128, 128
      %19 = vsyncadd [#allocation3], %s18
      %s21 = sshll.u32 [#allocation2], 4
      %s22 = int_to_ptr.vmem [resolvable:$true] %s21
      %24 = dma.hbm_to_vmem [thread:$0]  %s0, 128, %s22, [#allocation3]
    $region5: #{tpu_custom_call.1} parent=1 // pred_fallthru
      _
    // Predicated region
    $region6: #{tpu_custom_call.1} parent=1 // pred_check
      _
    $region7: #{tpu_custom_call.1} parent=1 // pred_check_branch
      %26 = sbr.rel (0) target = $region9
    $region8: #{tpu_custom_call.1} parent=1 // pred_region
      %s28 = ssub.s32 2048, 2048
      %29 = vsyncadd [#allocation6], %s28
      %s30 = sshll.u32 [#allocation5], 4
      %s31 = int_to_ptr.vmem [resolvable:$true] %s30
      %36 = dma.hbm_to_vmem [thread:$0]  %s1, 2048, %s31, [#allocation6], 128, 128, 8
    $region9: #{tpu_custom_call.1} parent=1 // pred_fallthru
      _
    // Predicated region
    $region10: #{tpu_custom_call.1} parent=1 // pred_check
      _
    $region11: #{tpu_custom_call.1} parent=1 // pred_check_branch
      %38 = sbr.rel (0) target = $region13
    $region12: #{tpu_custom_call.1} parent=1 // pred_region
      %s40 = ssub.s32 2048, 2048
      %41 = vsyncadd [#allocation6], %s40
      %s42 = sshll.u32 [#allocation7], 4
      %s43 = int_to_ptr.vmem [resolvable:$true] %s42
      %48 = dma.hbm_to_vmem [thread:$0]  %s2, 2048, %s43, [#allocation6], 128, 128, 8
    $region13: #{tpu_custom_call.1} parent=1 // pred_fallthru
      _
    // Predicated region
    $region14: #{tpu_custom_call.1} parent=1 // pred_check
      _
    $region15: #{tpu_custom_call.1} parent=1 // pred_check_branch
      %50 = sbr.rel (0) target = $region17
    $region16: #{tpu_custom_call.1} parent=1 // pred_region
      %51 = dma.done [#allocation3], 128
    $region17: #{tpu_custom_call.1} parent=1 // pred_fallthru
      _
    // Predicated region
    $region18: #{tpu_custom_call.1} parent=1 // pred_check
      _
    $region19: #{tpu_custom_call.1} parent=1 // pred_check_branch
      %53 = sbr.rel (0) target = $region21
    $region20: #{tpu_custom_call.1} parent=1 // pred_region
      %54 = dma.done [#allocation6], 2048
    $region21: #{tpu_custom_call.1} parent=1 // pred_fallthru
      _
    // Predicated region
    $region22: #{tpu_custom_call.1} parent=1 // pred_check
      _
    $region23: #{tpu_custom_call.1} parent=1 // pred_check_branch
      %56 = sbr.rel (0) target = $region25
    $region24: #{tpu_custom_call.1} parent=1 // pred_region
      %57 = dma.done [#allocation6], 2048
    $region25: #{tpu_custom_call.1} parent=1 // pred_fallthru
      _
    %v58 = vld [vmem:[#allocation2] sm:$0xff]
    %v59 = vmul.f32 %v58, %v58
    %60 = vadd.xlane.f32.xlu0 %v59
    %v61 = vpop.xlane.xlu0 %60
    %v62 = vmax.f32 %v61, 1e-16
    %v63 = vrsqrt.pop %v62
    %v64 = vld [vmem:[#allocation7] sm:$0xff]
    %v65 = vld [vmem:[#allocation7 + $0x8] sm:$0xff]
    %v66 = vld [vmem:[#allocation7 + $0x10] sm:$0xff]
    %v67 = vld [vmem:[#allocation7 + $0x18] sm:$0xff]
    %v68 = vld [vmem:[#allocation7 + $0x20] sm:$0xff]
    %v69 = vld [vmem:[#allocation7 + $0x28] sm:$0xff]
    %v70 = vld [vmem:[#allocation7 + $0x30] sm:$0xff]
    %v71 = vld [vmem:[#allocation7 + $0x38] sm:$0xff]
    %v72 = vld [vmem:[#allocation7 + $0x40] sm:$0xff]
    %v73 = vld [vmem:[#allocation7 + $0x48] sm:$0xff]
    %v74 = vld [vmem:[#allocation7 + $0x50] sm:$0xff]
    %v75 = vld [vmem:[#allocation7 + $0x58] sm:$0xff]
    %v76 = vld [vmem:[#allocation7 + $0x60] sm:$0xff]
    %v77 = vld [vmem:[#allocation7 + $0x68] sm:$0xff]
    %v78 = vld [vmem:[#allocation7 + $0x70] sm:$0xff]
    %v79 = vld [vmem:[#allocation7 + $0x78] sm:$0xff]
    %80 = vmatprep.subr.mxu0 0.0
    %81 = vmatpush1.xpose.msra.mxu0 %v64
    %82 = vmatprep.subr.mxu0 0.0
    %83 = vmatpush1.xpose.msra.mxu0 %v65
    %84 = vmatprep.subr.mxu0 0.0
    %85 = vmatpush1.xpose.msra.mxu0 %v66
    %86 = vmatprep.subr.mxu0 0.0
    %87 = vmatpush1.xpose.msra.mxu0 %v67
    %88 = vmatprep.subr.mxu0 0.0
    %89 = vmatpush1.xpose.msra.mxu0 %v68
    %90 = vmatprep.subr.mxu0 0.0
    %91 = vmatpush1.xpose.msra.mxu0 %v69
    %92 = vmatprep.subr.mxu0 0.0
    %93 = vmatpush1.xpose.msra.mxu0 %v70
    %94 = vmatprep.subr.mxu0 0.0
    %95 = vmatpush1.xpose.msra.mxu0 %v71
    %96 = vmatprep.subr.mxu0 0.0
    %97 = vmatpush1.xpose.msra.mxu0 %v72
    %98 = vmatprep.subr.mxu0 0.0
    %99 = vmatpush1.xpose.msra.mxu0 %v73
    %100 = vmatprep.subr.mxu0 0.0
    %101 = vmatpush1.xpose.msra.mxu0 %v74
    %102 = vmatprep.subr.mxu0 0.0
    %103 = vmatpush1.xpose.msra.mxu0 %v75
    %104 = vmatprep.subr.mxu0 0.0
    %105 = vmatpush1.xpose.msra.mxu0 %v76
    %106 = vmatprep.subr.mxu0 0.0
    %107 = vmatpush1.xpose.msra.mxu0 %v77
    %108 = vmatprep.subr.mxu0 0.0
    %109 = vmatpush1.xpose.msra.mxu0 %v78
    %110 = vmatprep.subr.mxu0 0.0
    %111 = vmatpush1.xpose.msra.mxu0 %v79
    %112 = vmatprep.subr.mxu0 0.0
    %113 = vmatpush1.xpose.msra.mxu0 0.0
    %114 = vmatprep.subr.mxu0 0.0
    %115 = vmatpush1.xpose.msra.mxu0 0.0
    %116 = vmatprep.subr.mxu0 0.0
    %117 = vmatpush1.xpose.msra.mxu0 0.0
    %118 = vmatprep.subr.mxu0 0.0
    %119 = vmatpush1.xpose.msra.mxu0 0.0
    %120 = vmatprep.subr.mxu0 0.0
    %121 = vmatpush1.xpose.msra.mxu0 0.0
    %122 = vmatprep.subr.mxu0 0.0
    %123 = vmatpush1.xpose.msra.mxu0 0.0
    %124 = vmatprep.subr.mxu0 0.0
    %125 = vmatpush1.xpose.msra.mxu0 0.0
    %126 = vmatprep.subr.mxu0 0.0
    %127 = vmatpush1.xpose.msra.mxu0 0.0
    %128 = vmatprep.subr.mxu0 0.0
    %129 = vmatpush1.xpose.msra.mxu0 0.0
    %130 = vmatprep.subr.mxu0 0.0
    %131 = vmatpush1.xpose.msra.mxu0 0.0
    %132 = vmatprep.subr.mxu0 0.0
    %133 = vmatpush1.xpose.msra.mxu0 0.0
    %134 = vmatprep.subr.mxu0 0.0
    %135 = vmatpush1.xpose.msra.mxu0 0.0
    %136 = vmatprep.subr.mxu0 0.0
    %137 = vmatpush1.xpose.msra.mxu0 0.0
    %138 = vmatprep.subr.mxu0 0.0
    %139 = vmatpush1.xpose.msra.mxu0 0.0
    %140 = vmatprep.subr.mxu0 0.0
    %141 = vmatpush1.xpose.msra.mxu0 0.0
    %142 = vmatprep.subr.mxu0 0.0
    %143 = vmatpush1.xpose.msra.mxu0 0.0
    %144 = vmatprep.mubr.f32.mxu0 0.0
    %145 = vmatmul.mubr.f32.gmra.mrb[0].mxu0 %v58
    %v146 = vpop.f32.mrb[0].mxu0
    %v147 = vadd.f32 0.0, %v146
    %v148 = vpop.f32.mrb[0].mxu0
    %149 = vdwg.mxu0
    %v150 = vmul.f32 %v147, %v63
    %151 = vmax.xlane.f32.xlu0 %v150
    %v152 = vpop.xlane.xlu0 %151
    %v153 = vsub.f32 %v150, %v152
    %v154 = vmul.f32 %v153, 1.442695
    %v155 = vpow.pop %v154
    %156 = vadd.xlane.f32.xlu0 %v155
    %v157 = vpop.xlane.xlu0 %156
    %v158 = vrcp.pop %v157
    %v159 = vmul.f32 %v155, %v158
    %vm160 = vcmp.gt.f32.partialorder %v159, 0.02
    %v161 = vsel %vm160, %v159, 0.0
    %v162 = vsel %vm160, 0.0, 1.0
    %v163 = vrot.slane %v162, 4
    %v164 = vadd.f32 %v162, %v163
    %v165 = vrot.slane %v164, 2
    %v166 = vadd.f32 %v164, %v165
    %v167 = vrot.slane %v166, 1
    %v168 = vadd.f32 %v166, %v167
    %169 = vst [vmem:[#allocation11] sm:$0x1] %v168
    %v170 = vadd.f32 %v161, 1e-15
    %171 = vadd.xlane.f32.xlu0 %v170
    %v172 = vpop.xlane.xlu0 %171
    %v173 = vrcp.pop %v172
    %v174 = vmul.f32 %v170, %v173
    %v175 = vsub.f32 0.0, %v174
    %v176 = vadd.f32 %v174, 0.001
    %v177 = vlog2.pop %v176
    %v178 = vmul.f32 %v177, 0.6931472
    %v179 = vmul.f32 %v175, %v178
    %v180 = vrot.slane %v179, 4
    %v181 = vadd.f32 %v179, %v180
    %v182 = vrot.slane %v181, 2
    %v183 = vadd.f32 %v181, %v182
    %v184 = vrot.slane %v183, 1
    %v185 = vadd.f32 %v183, %v184
    %186 = vst [vmem:[#allocation9] sm:$0x1] %v185
    %v187 = vld [vmem:[#allocation5] sm:$0xff]
    %v188 = vld [vmem:[#allocation5 + $0x8] sm:$0xff]
    %v189 = vld [vmem:[#allocation5 + $0x10] sm:$0xff]
    %v190 = vld [vmem:[#allocation5 + $0x18] sm:$0xff]
    %v191 = vld [vmem:[#allocation5 + $0x20] sm:$0xff]
    %v192 = vld [vmem:[#allocation5 + $0x28] sm:$0xff]
    %v193 = vld [vmem:[#allocation5 + $0x30] sm:$0xff]
    %v194 = vld [vmem:[#allocation5 + $0x38] sm:$0xff]
    %v195 = vld [vmem:[#allocation5 + $0x40] sm:$0xff]
    %v196 = vld [vmem:[#allocation5 + $0x48] sm:$0xff]
    %v197 = vld [vmem:[#allocation5 + $0x50] sm:$0xff]
    %v198 = vld [vmem:[#allocation5 + $0x58] sm:$0xff]
    %v199 = vld [vmem:[#allocation5 + $0x60] sm:$0xff]
    %v200 = vld [vmem:[#allocation5 + $0x68] sm:$0xff]
    %v201 = vld [vmem:[#allocation5 + $0x70] sm:$0xff]
    %v202 = vld [vmem:[#allocation5 + $0x78] sm:$0xff]
    %203 = vmatprep.subr.mxu0 0.0
    %204 = vmatpush1.msra.mxu0 %v187
    %205 = vmatprep.subr.mxu0 0.0
    %206 = vmatpush1.msra.mxu0 %v188
    %207 = vmatprep.subr.mxu0 0.0
    %208 = vmatpush1.msra.mxu0 %v189
    %209 = vmatprep.subr.mxu0 0.0
    %210 = vmatpush1.msra.mxu0 %v190
    %211 = vmatprep.subr.mxu0 0.0
    %212 = vmatpush1.msra.mxu0 %v191
    %213 = vmatprep.subr.mxu0 0.0
    %214 = vmatpush1.msra.mxu0 %v192
    %215 = vmatprep.subr.mxu0 0.0
    %216 = vmatpush1.msra.mxu0 %v193
    %217 = vmatprep.subr.mxu0 0.0
    %218 = vmatpush1.msra.mxu0 %v194
    %219 = vmatprep.subr.mxu0 0.0
    %220 = vmatpush1.msra.mxu0 %v195
    %221 = vmatprep.subr.mxu0 0.0
    %222 = vmatpush1.msra.mxu0 %v196
    %223 = vmatprep.subr.mxu0 0.0
    %224 = vmatpush1.msra.mxu0 %v197
    %225 = vmatprep.subr.mxu0 0.0
    %226 = vmatpush1.msra.mxu0 %v198
    %227 = vmatprep.subr.mxu0 0.0
    %228 = vmatpush1.msra.mxu0 %v199
    %229 = vmatprep.subr.mxu0 0.0
    %230 = vmatpush1.msra.mxu0 %v200
    %231 = vmatprep.subr.mxu0 0.0
    %232 = vmatpush1.msra.mxu0 %v201
    %233 = vmatprep.subr.mxu0 0.0
    %234 = vmatpush1.msra.mxu0 %v202
    %235 = vmatprep.subr.mxu0 0.0
    %236 = vmatpush1.msra.mxu0 0.0
    %237 = vmatprep.subr.mxu0 0.0
    %238 = vmatpush1.msra.mxu0 0.0
    %239 = vmatprep.subr.mxu0 0.0
    %240 = vmatpush1.msra.mxu0 0.0
    %241 = vmatprep.subr.mxu0 0.0
    %242 = vmatpush1.msra.mxu0 0.0
    %243 = vmatprep.subr.mxu0 0.0
    %244 = vmatpush1.msra.mxu0 0.0
    %245 = vmatprep.subr.mxu0 0.0
    %246 = vmatpush1.msra.mxu0 0.0
    %247 = vmatprep.subr.mxu0 0.0
    %248 = vmatpush1.msra.mxu0 0.0
    %249 = vmatprep.subr.mxu0 0.0
    %250 = vmatpush1.msra.mxu0 0.0
    %251 = vmatprep.subr.mxu0 0.0
    %252 = vmatpush1.msra.mxu0 0.0
    %253 = vmatprep.subr.mxu0 0.0
    %254 = vmatpush1.msra.mxu0 0.0
    %255 = vmatprep.subr.mxu0 0.0
    %256 = vmatpush1.msra.mxu0 0.0
    %257 = vmatprep.subr.mxu0 0.0
    %258 = vmatpush1.msra.mxu0 0.0
    %259 = vmatprep.subr.mxu0 0.0
    %260 = vmatpush1.msra.mxu0 0.0
    %261 = vmatprep.subr.mxu0 0.0
    %262 = vmatpush1.msra.mxu0 0.0
    %263 = vmatprep.subr.mxu0 0.0
    %264 = vmatpush1.msra.mxu0 0.0
    %265 = vmatprep.subr.mxu0 0.0
    %266 = vmatpush1.msra.mxu0 0.0
    %267 = vmatprep.mubr.f32.mxu0 0.0
    %268 = vmatmul.mubr.f32.gmra.mrb[0].mxu0 %v174
    %v269 = vpop.f32.mrb[0].mxu0
    %v270 = vadd.f32 0.0, %v269
    %v271 = vpop.f32.mrb[0].mxu0
    %272 = vdwg.mxu0
    %273 = vst [vmem:[#allocation8] sm:$0xff] %v270
    // Predicated region
    $region26: #{tpu_custom_call.1} parent=1 // pred_check
      _
    $region27: #{tpu_custom_call.1} parent=1 // pred_check_branch
      %275 = sbr.rel (0) target = $region29
    $region28: #{tpu_custom_call.1} parent=1 // pred_region
      %s277 = ssub.s32 128, 128
      %278 = vsyncadd [#allocation4], %s277
      %s280 = sshll.u32 [#allocation8], 4
      %s281 = int_to_ptr.vmem [resolvable:$true] %s280
      %283 = dma.vmem_to_hbm [thread:$0]  %s281, 128, %s3, [#allocation4]
    $region29: #{tpu_custom_call.1} parent=1 // pred_fallthru
      _
    // Predicated region
    $region30: #{tpu_custom_call.1} parent=1 // pred_check
      _
    $region31: #{tpu_custom_call.1} parent=1 // pred_check_branch
      %285 = sbr.rel (0) target = $region33
    $region32: #{tpu_custom_call.1} parent=1 // pred_region
      %s287 = ssub.s32 16, 16
      %288 = vsyncadd [#allocation10], %s287
      %s290 = sshll.u32 [#allocation9], 4
      %s291 = int_to_ptr.vmem [resolvable:$true] %s290
      %293 = dma.vmem_to_hbm [thread:$0]  %s291, 16, %s4, [#allocation10]
    $region33: #{tpu_custom_call.1} parent=1 // pred_fallthru
      _
    // Predicated region
    $region34: #{tpu_custom_call.1} parent=1 // pred_check
      _
    $region35: #{tpu_custom_call.1} parent=1 // pred_check_branch
      %295 = sbr.rel (0) target = $region37
    $region36: #{tpu_custom_call.1} parent=1 // pred_region
      %s297 = ssub.s32 16, 16
      %298 = vsyncadd [#allocation10], %s297
      %s300 = sshll.u32 [#allocation11], 4
      %s301 = int_to_ptr.vmem [resolvable:$true] %s300
      %303 = dma.vmem_to_hbm [thread:$0]  %s301, 16, %s5, [#allocation10]
    $region37: #{tpu_custom_call.1} parent=1 // pred_fallthru
      _
    // Predicated region
    $region38: #{tpu_custom_call.1} parent=1 // pred_check
      _
    $region39: #{tpu_custom_call.1} parent=1 // pred_check_branch
      %305 = sbr.rel (0) target = $region41
    $region40: #{tpu_custom_call.1} parent=1 // pred_region
      %306 = dma.done [#allocation4], 128
    $region41: #{tpu_custom_call.1} parent=1 // pred_fallthru
      _
    // Predicated region
    $region42: #{tpu_custom_call.1} parent=1 // pred_check
      _
    $region43: #{tpu_custom_call.1} parent=1 // pred_check_branch
      %308 = sbr.rel (0) target = $region45
    $region44: #{tpu_custom_call.1} parent=1 // pred_region
      %309 = dma.done [#allocation10], 16
    $region45: #{tpu_custom_call.1} parent=1 // pred_fallthru
      _
    // Predicated region
    $region46: #{tpu_custom_call.1} parent=1 // pred_check
      _
    $region47: #{tpu_custom_call.1} parent=1 // pred_check_branch
      %311 = sbr.rel (0) target = $region49
    $region48: #{tpu_custom_call.1} parent=1 // pred_region
      %312 = dma.done [#allocation10], 16
    $region49: #{tpu_custom_call.1} parent=1 // pred_fallthru
      _
    %313 = vsyncpa [#allocation3], 1
    %314 = vsyncpa [#allocation6], 1
    %315 = vsyncpa [#allocation4], 1
    %316 = vsyncpa [#allocation10], 1

</llo_original>
